<compile_context>
chip_gen: v7x
topology: tpu7x:2x2x1
jax: 0.10.0
libtpu: 0.0.40
codegen_flags: <defaults>
</compile_context>

<pallas_src>
import jax
import jax.numpy as jnp
from jax.experimental import pallas as pl
from jax.experimental.pallas import tpu as pltpu

# YoloLoss hyper-parameters (module defaults).
S = 7
B = 2
C = 80
NUM_PRED = 5
COORD = 5.0
NOOBJ = 0.5
D = NUM_PRED * B + C  # 90


def _iou_parts(px, py, pw, ph, tx, ty, tw, th):
    """Mid-point IoU numerator / denominator for (1, T) feature rows."""
    p_x1 = px - pw * 0.5
    p_x2 = px + pw * 0.5
    p_y1 = py - ph * 0.5
    p_y2 = py + ph * 0.5
    t_x1 = tx - tw * 0.5
    t_x2 = tx + tw * 0.5
    t_y1 = ty - th * 0.5
    t_y2 = ty + th * 0.5

    xi1 = jnp.maximum(p_x1, t_x1)
    yi1 = jnp.maximum(p_y1, t_y1)
    xi2 = jnp.minimum(p_x2, t_x2)
    yi2 = jnp.minimum(p_y2, t_y2)

    inter = jnp.maximum(xi2 - xi1, 0.0) * jnp.maximum(yi2 - yi1, 0.0)
    area_p = jnp.abs((p_x2 - p_x1) * (p_y2 - p_y1))
    area_t = jnp.abs((t_x2 - t_x1) * (t_y2 - t_y1))
    return inter, area_p + area_t - inter + 1e-6


def _per_cell_loss(p, t, recip):
    """Fused per-cell YOLO loss.

    p, t: (D, T) float32 arrays with features on the sublane axis and grid
    cells on the lane axis.  `recip` computes 1/x (exact or EUP approx).
    Returns a (1, T) per-cell loss (already scaled by coord / noobj weights).
    """
    per_cell = jnp.zeros((1, p.shape[1]), jnp.float32)

    for i in range(B):
        o = i * NUM_PRED
        conf_t = t[o:o + 1, :]
        x_p, y_p = p[o + 1:o + 2, :], p[o + 2:o + 3, :]
        w_p_raw, h_p_raw = p[o + 3:o + 4, :], p[o + 4:o + 5, :]
        x_t, y_t = t[o + 1:o + 2, :], t[o + 2:o + 3, :]
        w_t_raw, h_t_raw = t[o + 3:o + 4, :], t[o + 4:o + 5, :]

        xy = jnp.square(x_t - x_p) + jnp.square(y_t - y_p)
        box = (jnp.square(jnp.sqrt(jnp.abs(w_t_raw)) - jnp.sqrt(jnp.abs(w_p_raw)))
               + jnp.square(jnp.sqrt(jnp.abs(h_t_raw)) - jnp.sqrt(jnp.abs(h_p_raw))))

        inter, denom = _iou_parts(x_p, y_p, w_p_raw, h_p_raw,
                                  x_t, y_t, w_t_raw, h_t_raw)
        conf_p = p[o:o + 1, :] * (inter * recip(denom))
        sq_conf = jnp.square(conf_t - conf_p)

        # conf_loss + NOOBJ * noobj_loss fused into one weighted square.
        per_cell = (per_cell
                    + COORD * (xy + box) * conf_t
                    + sq_conf * (conf_t + NOOBJ * (1.0 - conf_t)))

    nb = NUM_PRED * B
    d_cls = t[nb:, :] - p[nb:, :]
    per_cell = per_cell + jnp.sum(jnp.square(d_cls) * t[nb:, :],
                                  axis=0, keepdims=True)
    return per_cell


def yolo_loss_kernel(pred_ref, target_ref, out_ref, acc_ref):
    i = pl.program_id(0)

    @pl.when(i == 0)
    def _init():
        acc_ref[...] = jnp.zeros_like(acc_ref)

    p = pred_ref[...]
    t = target_ref[...]
    # Upcast only if the caller fed a narrower dtype (e.g. bf16); f32 math
    # throughout (no bf16 intermediates -> safe on v5e).
    if p.dtype != jnp.float32:
        p = p.astype(jnp.float32)
    if t.dtype != jnp.float32:
        t = t.astype(jnp.float32)

    acc_ref[...] += _per_cell_loss(
        p, t, lambda d: pl.reciprocal(d, approx=True))

    @pl.when(i == pl.num_programs(0) - 1)
    def _finalize():
        out_ref[0, 0] = jnp.sum(acc_ref[...])


def _round_up(x, m):
    return (x + m - 1) // m * m


def yolo_loss(pred, target, tile_m=2048):
    """Forward pass of YoloLoss. pred/target: (..., S, S, 5*B + C)."""
    pred2d = jnp.reshape(pred, (-1, D))
    target2d = jnp.reshape(target, (-1, D))
    m = pred2d.shape[0]

    # Tile over cells; keep the tile small for tiny inputs, 2048 otherwise.
    # (90-padded-to-96 sublanes x 2048 lanes x 4B) x 2 inputs x 2 buffers
    # ~= 3.1 MiB -> comfortably under scoped VMEM on v5e/v6e/v7x.
    tile = min(tile_m, _round_up(m, 128))
    m_pad = _round_up(m, tile)

    # (D, M) layout: cells on the lane axis.  Do NOT pad D (keeps HBM traffic
    # minimal); zero-padded cells contribute exactly 0 to the loss.
    pred_t = jnp.pad(pred2d.T, ((0, 0), (0, m_pad - m)))
    target_t = jnp.pad(target2d.T, ((0, 0), (0, m_pad - m)))

    out = pl.pallas_call(
        yolo_loss_kernel,
        out_shape=jax.ShapeDtypeStruct((1, 1), jnp.float32),
        grid=(m_pad // tile,),
        in_specs=[
            pl.BlockSpec((D, tile), lambda i: (0, i)),
            pl.BlockSpec((D, tile), lambda i: (0, i)),
        ],
        out_specs=pl.BlockSpec(memory_space=pltpu.SMEM),
        scratch_shapes=[pltpu.VMEM((1, tile), jnp.float32)],
        compiler_params=pltpu.CompilerParams(
            dimension_semantics=("arbitrary",)),
    )(pred_t, target_t)
    # TODO(synk): a leading core-parallel grid axis with per-core partial sums
    # would additionally halve per-step overhead on v7x's 2 TensorCores.
    return out[0, 0]


def yolo_loss_reference(pred, target):
    """Pure-JAX reference with exact division (mirrors the PyTorch module)."""
    p = jnp.reshape(pred, (-1, D)).astype(jnp.float32).T
    t = jnp.reshape(target, (-1, D)).astype(jnp.float32).T
    return jnp.sum(_per_cell_loss(p, t, lambda d: 1.0 / d))


if __name__ == "__main__":
    batch = 2
    key = jax.random.PRNGKey(0)
    k_pred, k_target = jax.random.split(key)

    # pred: raw network output (any values); target: YOLO-style target tensor.
    pred = jax.random.normal(k_pred, (batch, S, S, D), dtype=jnp.float32)
    target = jax.random.uniform(k_target, (batch, S, S, D), dtype=jnp.float32)

    loss = jax.block_until_ready(yolo_loss(pred, target))

    ref = jax.block_until_ready(yolo_loss_reference(pred, target))
    assert jnp.allclose(loss, ref, rtol=2e-3, atol=1e-2), (loss, ref)

    print("KERNEL_OK")
</pallas_src>

<mosaic_0001>
module attributes {stable_mosaic.version = 11 : i64} {
  func.func @yolo_loss_kernel(%arg0: i32, %arg1: memref<90x128xf32, #tpu.memory_space<vmem>>, %arg2: memref<90x128xf32, #tpu.memory_space<vmem>>, %arg3: memref<1x1xf32, #tpu.memory_space<smem>>, %arg4: memref<1x128xf32, #tpu.memory_space<vmem>>) attributes {dimension_semantics = [#tpu.dimension_semantics<arbitrary>], iteration_bounds = array<i64: 1>, scalar_prefetch = 0 : i64, scratch_operands = 1 : i64, tpu.core_type = #tpu.core_type<tc>, window_params = [{transform_indices = @transform_0, window_bounds = array<i64: 90, 128>}, {transform_indices = @transform_1, window_bounds = array<i64: 90, 128>}, {transform_indices = @transform_2, window_bounds = array<i64: 1, 1>}]} {
    %c0_i32 = arith.constant 0 : i32
    %0 = arith.cmpi eq, %arg0, %c0_i32 : i32
    %1 = arith.extui %0 : i1 to i32
    %c0_i32_0 = arith.constant 0 : i32
    %2 = arith.cmpi ne, %1, %c0_i32_0 : i32
    scf.if %2 {
      %cst_39 = arith.constant 0.000000e+00 : f32
      %205 = vector.broadcast %cst_39 : f32 to vector<1x128xf32>
      %c0_40 = arith.constant 0 : index
      %c0_41 = arith.constant 0 : index
      %206 = vector.load %arg4[%c0_40, %c0_41] : memref<1x128xf32, #tpu.memory_space<vmem>>, vector<1x128xf32>
      tpu.vector_store %arg4[%c0_40, %c0_41], %205 {strides = array<i32>} : memref<1x128xf32, #tpu.memory_space<vmem>>, vector<1x128xf32>,
    } else {
    }
    %c0 = arith.constant 0 : index
    %c0_1 = arith.constant 0 : index
    %3 = vector.load %arg1[%c0, %c0_1] : memref<90x128xf32, #tpu.memory_space<vmem>>, vector<90x128xf32>
    %c0_2 = arith.constant 0 : index
    %c0_3 = arith.constant 0 : index
    %4 = vector.load %arg2[%c0_2, %c0_3] : memref<90x128xf32, #tpu.memory_space<vmem>>, vector<90x128xf32>
    %c0_4 = arith.constant 0 : index
    %c0_5 = arith.constant 0 : index
    %5 = vector.load %arg4[%c0_4, %c0_5] : memref<1x128xf32, #tpu.memory_space<vmem>>, vector<1x128xf32>
    %cst = arith.constant 0.000000e+00 : f32
    %6 = vector.broadcast %cst : f32 to vector<1x128xf32>
    %7 = vector.extract_strided_slice %4 {offsets = [0, 0], sizes = [1, 128], strides = [1, 1]} : vector<90x128xf32> to vector<1x128xf32>
    %8 = vector.extract_strided_slice %3 {offsets = [1, 0], sizes = [1, 128], strides = [1, 1]} : vector<90x128xf32> to vector<1x128xf32>
    %9 = vector.extract_strided_slice %3 {offsets = [2, 0], sizes = [1, 128], strides = [1, 1]} : vector<90x128xf32> to vector<1x128xf32>
    %10 = vector.extract_strided_slice %3 {offsets = [3, 0], sizes = [1, 128], strides = [1, 1]} : vector<90x128xf32> to vector<1x128xf32>
    %11 = vector.extract_strided_slice %3 {offsets = [4, 0], sizes = [1, 128], strides = [1, 1]} : vector<90x128xf32> to vector<1x128xf32>
    %12 = vector.extract_strided_slice %4 {offsets = [1, 0], sizes = [1, 128], strides = [1, 1]} : vector<90x128xf32> to vector<1x128xf32>
    %13 = vector.extract_strided_slice %4 {offsets = [2, 0], sizes = [1, 128], strides = [1, 1]} : vector<90x128xf32> to vector<1x128xf32>
    %14 = vector.extract_strided_slice %4 {offsets = [3, 0], sizes = [1, 128], strides = [1, 1]} : vector<90x128xf32> to vector<1x128xf32>
    %15 = vector.extract_strided_slice %4 {offsets = [4, 0], sizes = [1, 128], strides = [1, 1]} : vector<90x128xf32> to vector<1x128xf32>
    %16 = arith.subf %12, %8 : vector<1x128xf32>
    %17 = arith.mulf %16, %16 : vector<1x128xf32>
    %18 = arith.subf %13, %9 : vector<1x128xf32>
    %19 = arith.mulf %18, %18 : vector<1x128xf32>
    %20 = arith.addf %17, %19 : vector<1x128xf32>
    %21 = math.absf %14 : vector<1x128xf32>
    %22 = math.sqrt %21 : vector<1x128xf32>
    %23 = math.absf %10 : vector<1x128xf32>
    %24 = math.sqrt %23 : vector<1x128xf32>
    %25 = arith.subf %22, %24 : vector<1x128xf32>
    %26 = arith.mulf %25, %25 : vector<1x128xf32>
    %27 = math.absf %15 : vector<1x128xf32>
    %28 = math.sqrt %27 : vector<1x128xf32>
    %29 = math.absf %11 : vector<1x128xf32>
    %30 = math.sqrt %29 : vector<1x128xf32>
    %31 = arith.subf %28, %30 : vector<1x128xf32>
    %32 = arith.mulf %31, %31 : vector<1x128xf32>
    %33 = arith.addf %26, %32 : vector<1x128xf32>
    %cst_6 = arith.constant 5.000000e-01 : f32
    %34 = vector.broadcast %cst_6 : f32 to vector<1x128xf32>
    %35 = arith.mulf %10, %34 : vector<1x128xf32>
    %36 = arith.subf %8, %35 : vector<1x128xf32>
    %cst_7 = arith.constant 5.000000e-01 : f32
    %37 = vector.broadcast %cst_7 : f32 to vector<1x128xf32>
    %38 = arith.mulf %10, %37 : vector<1x128xf32>
    %39 = arith.addf %8, %38 : vector<1x128xf32>
    %cst_8 = arith.constant 5.000000e-01 : f32
    %40 = vector.broadcast %cst_8 : f32 to vector<1x128xf32>
    %41 = arith.mulf %11, %40 : vector<1x128xf32>
    %42 = arith.subf %9, %41 : vector<1x128xf32>
    %cst_9 = arith.constant 5.000000e-01 : f32
    %43 = vector.broadcast %cst_9 : f32 to vector<1x128xf32>
    %44 = arith.mulf %11, %43 : vector<1x128xf32>
    %45 = arith.addf %9, %44 : vector<1x128xf32>
    %cst_10 = arith.constant 5.000000e-01 : f32
    %46 = vector.broadcast %cst_10 : f32 to vector<1x128xf32>
    %47 = arith.mulf %14, %46 : vector<1x128xf32>
    %48 = arith.subf %12, %47 : vector<1x128xf32>
    %cst_11 = arith.constant 5.000000e-01 : f32
    %49 = vector.broadcast %cst_11 : f32 to vector<1x128xf32>
    %50 = arith.mulf %14, %49 : vector<1x128xf32>
    %51 = arith.addf %12, %50 : vector<1x128xf32>
    %cst_12 = arith.constant 5.000000e-01 : f32
    %52 = vector.broadcast %cst_12 : f32 to vector<1x128xf32>
    %53 = arith.mulf %15, %52 : vector<1x128xf32>
    %54 = arith.subf %13, %53 : vector<1x128xf32>
    %cst_13 = arith.constant 5.000000e-01 : f32
    %55 = vector.broadcast %cst_13 : f32 to vector<1x128xf32>
    %56 = arith.mulf %15, %55 : vector<1x128xf32>
    %57 = arith.addf %13, %56 : vector<1x128xf32>
    %58 = arith.maximumf %36, %48 : vector<1x128xf32>
    %59 = arith.maximumf %42, %54 : vector<1x128xf32>
    %60 = arith.minimumf %39, %51 : vector<1x128xf32>
    %61 = arith.minimumf %45, %57 : vector<1x128xf32>
    %62 = arith.subf %60, %58 : vector<1x128xf32>
    %cst_14 = arith.constant 0.000000e+00 : f32
    %63 = vector.broadcast %cst_14 : f32 to vector<1x128xf32>
    %64 = arith.maximumf %62, %63 : vector<1x128xf32>
    %65 = arith.subf %61, %59 : vector<1x128xf32>
    %cst_15 = arith.constant 0.000000e+00 : f32
    %66 = vector.broadcast %cst_15 : f32 to vector<1x128xf32>
    %67 = arith.maximumf %65, %66 : vector<1x128xf32>
    %68 = arith.mulf %64, %67 : vector<1x128xf32>
    %69 = arith.subf %39, %36 : vector<1x128xf32>
    %70 = arith.subf %45, %42 : vector<1x128xf32>
    %71 = arith.mulf %69, %70 : vector<1x128xf32>
    %72 = math.absf %71 : vector<1x128xf32>
    %73 = arith.subf %51, %48 : vector<1x128xf32>
    %74 = arith.subf %57, %54 : vector<1x128xf32>
    %75 = arith.mulf %73, %74 : vector<1x128xf32>
    %76 = math.absf %75 : vector<1x128xf32>
    %77 = arith.addf %72, %76 : vector<1x128xf32>
    %78 = arith.subf %77, %68 : vector<1x128xf32>
    %cst_16 = arith.constant 9.99999997E-7 : f32
    %79 = vector.broadcast %cst_16 : f32 to vector<1x128xf32>
    %80 = arith.addf %78, %79 : vector<1x128xf32>
    %81 = vector.extract_strided_slice %3 {offsets = [0, 0], sizes = [1, 128], strides = [1, 1]} : vector<90x128xf32> to vector<1x128xf32>
    %82 = tpu.reciprocal %80 {approx = true} : vector<1x128xf32> -> vector<1x128xf32>
    %83 = arith.mulf %68, %82 : vector<1x128xf32>
    %84 = arith.mulf %81, %83 : vector<1x128xf32>
    %85 = arith.subf %7, %84 : vector<1x128xf32>
    %86 = arith.mulf %85, %85 : vector<1x128xf32>
    %87 = arith.addf %20, %33 : vector<1x128xf32>
    %cst_17 = arith.constant 5.000000e+00 : f32
    %88 = vector.broadcast %cst_17 : f32 to vector<1x128xf32>
    %89 = arith.mulf %88, %87 : vector<1x128xf32>
    %90 = arith.mulf %89, %7 : vector<1x128xf32>
    %91 = arith.addf %6, %90 : vector<1x128xf32>
    %cst_18 = arith.constant 1.000000e+00 : f32
    %92 = vector.broadcast %cst_18 : f32 to vector<1x128xf32>
    %93 = arith.subf %92, %7 : vector<1x128xf32>
    %cst_19 = arith.constant 5.000000e-01 : f32
    %94 = vector.broadcast %cst_19 : f32 to vector<1x128xf32>
    %95 = arith.mulf %94, %93 : vector<1x128xf32>
    %96 = arith.addf %7, %95 : vector<1x128xf32>
    %97 = arith.mulf %86, %96 : vector<1x128xf32>
    %98 = arith.addf %91, %97 : vector<1x128xf32>
    %99 = vector.extract_strided_slice %4 {offsets = [5, 0], sizes = [1, 128], strides = [1, 1]} : vector<90x128xf32> to vector<1x128xf32>
    %100 = vector.extract_strided_slice %3 {offsets = [6, 0], sizes = [1, 128], strides = [1, 1]} : vector<90x128xf32> to vector<1x128xf32>
    %101 = vector.extract_strided_slice %3 {offsets = [7, 0], sizes = [1, 128], strides = [1, 1]} : vector<90x128xf32> to vector<1x128xf32>
    %102 = vector.extract_strided_slice %3 {offsets = [8, 0], sizes = [1, 128], strides = [1, 1]} : vector<90x128xf32> to vector<1x128xf32>
    %103 = vector.extract_strided_slice %3 {offsets = [9, 0], sizes = [1, 128], strides = [1, 1]} : vector<90x128xf32> to vector<1x128xf32>
    %104 = vector.extract_strided_slice %4 {offsets = [6, 0], sizes = [1, 128], strides = [1, 1]} : vector<90x128xf32> to vector<1x128xf32>
    %105 = vector.extract_strided_slice %4 {offsets = [7, 0], sizes = [1, 128], strides = [1, 1]} : vector<90x128xf32> to vector<1x128xf32>
    %106 = vector.extract_strided_slice %4 {offsets = [8, 0], sizes = [1, 128], strides = [1, 1]} : vector<90x128xf32> to vector<1x128xf32>
    %107 = vector.extract_strided_slice %4 {offsets = [9, 0], sizes = [1, 128], strides = [1, 1]} : vector<90x128xf32> to vector<1x128xf32>
    %108 = arith.subf %104, %100 : vector<1x128xf32>
    %109 = arith.mulf %108, %108 : vector<1x128xf32>
    %110 = arith.subf %105, %101 : vector<1x128xf32>
    %111 = arith.mulf %110, %110 : vector<1x128xf32>
    %112 = arith.addf %109, %111 : vector<1x128xf32>
    %113 = math.absf %106 : vector<1x128xf32>
    %114 = math.sqrt %113 : vector<1x128xf32>
    %115 = math.absf %102 : vector<1x128xf32>
    %116 = math.sqrt %115 : vector<1x128xf32>
    %117 = arith.subf %114, %116 : vector<1x128xf32>
    %118 = arith.mulf %117, %117 : vector<1x128xf32>
    %119 = math.absf %107 : vector<1x128xf32>
    %120 = math.sqrt %119 : vector<1x128xf32>
    %121 = math.absf %103 : vector<1x128xf32>
    %122 = math.sqrt %121 : vector<1x128xf32>
    %123 = arith.subf %120, %122 : vector<1x128xf32>
    %124 = arith.mulf %123, %123 : vector<1x128xf32>
    %125 = arith.addf %118, %124 : vector<1x128xf32>
    %cst_20 = arith.constant 5.000000e-01 : f32
    %126 = vector.broadcast %cst_20 : f32 to vector<1x128xf32>
    %127 = arith.mulf %102, %126 : vector<1x128xf32>
    %128 = arith.subf %100, %127 : vector<1x128xf32>
    %cst_21 = arith.constant 5.000000e-01 : f32
    %129 = vector.broadcast %cst_21 : f32 to vector<1x128xf32>
    %130 = arith.mulf %102, %129 : vector<1x128xf32>
    %131 = arith.addf %100, %130 : vector<1x128xf32>
    %cst_22 = arith.constant 5.000000e-01 : f32
    %132 = vector.broadcast %cst_22 : f32 to vector<1x128xf32>
    %133 = arith.mulf %103, %132 : vector<1x128xf32>
    %134 = arith.subf %101, %133 : vector<1x128xf32>
    %cst_23 = arith.constant 5.000000e-01 : f32
    %135 = vector.broadcast %cst_23 : f32 to vector<1x128xf32>
    %136 = arith.mulf %103, %135 : vector<1x128xf32>
    %137 = arith.addf %101, %136 : vector<1x128xf32>
    %cst_24 = arith.constant 5.000000e-01 : f32
    %138 = vector.broadcast %cst_24 : f32 to vector<1x128xf32>
    %139 = arith.mulf %106, %138 : vector<1x128xf32>
    %140 = arith.subf %104, %139 : vector<1x128xf32>
    %cst_25 = arith.constant 5.000000e-01 : f32
    %141 = vector.broadcast %cst_25 : f32 to vector<1x128xf32>
    %142 = arith.mulf %106, %141 : vector<1x128xf32>
    %143 = arith.addf %104, %142 : vector<1x128xf32>
    %cst_26 = arith.constant 5.000000e-01 : f32
    %144 = vector.broadcast %cst_26 : f32 to vector<1x128xf32>
    %145 = arith.mulf %107, %144 : vector<1x128xf32>
    %146 = arith.subf %105, %145 : vector<1x128xf32>
    %cst_27 = arith.constant 5.000000e-01 : f32
    %147 = vector.broadcast %cst_27 : f32 to vector<1x128xf32>
    %148 = arith.mulf %107, %147 : vector<1x128xf32>
    %149 = arith.addf %105, %148 : vector<1x128xf32>
    %150 = arith.maximumf %128, %140 : vector<1x128xf32>
    %151 = arith.maximumf %134, %146 : vector<1x128xf32>
    %152 = arith.minimumf %131, %143 : vector<1x128xf32>
    %153 = arith.minimumf %137, %149 : vector<1x128xf32>
    %154 = arith.subf %152, %150 : vector<1x128xf32>
    %cst_28 = arith.constant 0.000000e+00 : f32
    %155 = vector.broadcast %cst_28 : f32 to vector<1x128xf32>
    %156 = arith.maximumf %154, %155 : vector<1x128xf32>
    %157 = arith.subf %153, %151 : vector<1x128xf32>
    %cst_29 = arith.constant 0.000000e+00 : f32
    %158 = vector.broadcast %cst_29 : f32 to vector<1x128xf32>
    %159 = arith.maximumf %157, %158 : vector<1x128xf32>
    %160 = arith.mulf %156, %159 : vector<1x128xf32>
    %161 = arith.subf %131, %128 : vector<1x128xf32>
    %162 = arith.subf %137, %134 : vector<1x128xf32>
    %163 = arith.mulf %161, %162 : vector<1x128xf32>
    %164 = math.absf %163 : vector<1x128xf32>
    %165 = arith.subf %143, %140 : vector<1x128xf32>
    %166 = arith.subf %149, %146 : vector<1x128xf32>
    %167 = arith.mulf %165, %166 : vector<1x128xf32>
    %168 = math.absf %167 : vector<1x128xf32>
    %169 = arith.addf %164, %168 : vector<1x128xf32>
    %170 = arith.subf %169, %160 : vector<1x128xf32>
    %cst_30 = arith.constant 9.99999997E-7 : f32
    %171 = vector.broadcast %cst_30 : f32 to vector<1x128xf32>
    %172 = arith.addf %170, %171 : vector<1x128xf32>
    %173 = vector.extract_strided_slice %3 {offsets = [5, 0], sizes = [1, 128], strides = [1, 1]} : vector<90x128xf32> to vector<1x128xf32>
    %174 = tpu.reciprocal %172 {approx = true} : vector<1x128xf32> -> vector<1x128xf32>
    %175 = arith.mulf %160, %174 : vector<1x128xf32>
    %176 = arith.mulf %173, %175 : vector<1x128xf32>
    %177 = arith.subf %99, %176 : vector<1x128xf32>
    %178 = arith.mulf %177, %177 : vector<1x128xf32>
    %179 = arith.addf %112, %125 : vector<1x128xf32>
    %cst_31 = arith.constant 5.000000e+00 : f32
    %180 = vector.broadcast %cst_31 : f32 to vector<1x128xf32>
    %181 = arith.mulf %180, %179 : vector<1x128xf32>
    %182 = arith.mulf %181, %99 : vector<1x128xf32>
    %183 = arith.addf %98, %182 : vector<1x128xf32>
    %cst_32 = arith.constant 1.000000e+00 : f32
    %184 = vector.broadcast %cst_32 : f32 to vector<1x128xf32>
    %185 = arith.subf %184, %99 : vector<1x128xf32>
    %cst_33 = arith.constant 5.000000e-01 : f32
    %186 = vector.broadcast %cst_33 : f32 to vector<1x128xf32>
    %187 = arith.mulf %186, %185 : vector<1x128xf32>
    %188 = arith.addf %99, %187 : vector<1x128xf32>
    %189 = arith.mulf %178, %188 : vector<1x128xf32>
    %190 = arith.addf %183, %189 : vector<1x128xf32>
    %191 = vector.extract_strided_slice %4 {offsets = [10, 0], sizes = [80, 128], strides = [1, 1]} : vector<90x128xf32> to vector<80x128xf32>
    %192 = vector.extract_strided_slice %3 {offsets = [10, 0], sizes = [80, 128], strides = [1, 1]} : vector<90x128xf32> to vector<80x128xf32>
    %193 = arith.subf %191, %192 : vector<80x128xf32>
    %194 = arith.mulf %193, %193 : vector<80x128xf32>
    %195 = vector.extract_strided_slice %4 {offsets = [10, 0], sizes = [80, 128], strides = [1, 1]} : vector<90x128xf32> to vector<80x128xf32>
    %196 = arith.mulf %194, %195 : vector<80x128xf32>
    %cst_34 = arith.constant dense<0.000000e+00> : vector<128xf32>
    %197 = vector.multi_reduction <add>, %196, %cst_34 [0] : vector<80x128xf32> to vector<128xf32>
    %198 = vector.shape_cast %197 : vector<128xf32> to vector<1x128xf32>
    %199 = arith.addf %190, %198 : vector<1x128xf32>
    %200 = arith.addf %5, %199 : vector<1x128xf32>
    %c0_35 = arith.constant 0 : index
    %c0_36 = arith.constant 0 : index
    %201 = vector.load %arg4[%c0_35, %c0_36] : memref<1x128xf32, #tpu.memory_space<vmem>>, vector<1x128xf32>
    tpu.vector_store %arg4[%c0_35, %c0_36], %200 {strides = array<i32>} : memref<1x128xf32, #tpu.memory_space<vmem>>, vector<1x128xf32>,
    %c0_i32_37 = arith.constant 0 : i32
    %202 = arith.cmpi eq, %arg0, %c0_i32_37 : i32
    %203 = arith.extui %202 : i1 to i32
    %c0_i32_38 = arith.constant 0 : i32
    %204 = arith.cmpi ne, %203, %c0_i32_38 : i32
    scf.if %204 {
      %c0_39 = arith.constant 0 : index
      %c0_40 = arith.constant 0 : index
      %205 = vector.load %arg4[%c0_39, %c0_40] : memref<1x128xf32, #tpu.memory_space<vmem>>, vector<1x128xf32>
      %206 = vector.shape_cast %205 : vector<1x128xf32> to vector<1x1x128xf32>
      %cst_41 = arith.constant dense<0.000000e+00> : vector<1xf32>
      %207 = vector.multi_reduction <add>, %206, %cst_41 [1, 2] : vector<1x1x128xf32> to vector<1xf32>
      %208 = vector.shape_cast %207 : vector<1xf32> to vector<1x1x1xf32>
      %209 = vector.extract %208[0, 0, 0] : f32 from vector<1x1x1xf32>
      %c0_42 = arith.constant 0 : index
      %c0_43 = arith.constant 0 : index
      %210 = memref.load %arg3[%c0_42, %c0_43] : memref<1x1xf32, #tpu.memory_space<smem>>
      memref.store %209, %arg3[%c0_42, %c0_43] : memref<1x1xf32, #tpu.memory_space<smem>>
    } else {
    }
    return
  }
  func.func @transform_0(%arg0: i32) -> (i32, i32) {
    %c0_i32 = arith.constant 0 : i32
    %c0_i32_0 = arith.constant 0 : i32
    return %c0_i32, %arg0 : i32, i32
  }
  func.func @transform_1(%arg0: i32) -> (i32, i32) {
    %c0_i32 = arith.constant 0 : i32
    %c0_i32_0 = arith.constant 0 : i32
    return %c0_i32, %arg0 : i32, i32
  }
  func.func @transform_2(%arg0: i32) -> (i32, i32) {
    %c0_i32 = arith.constant 0 : i32
    %c0_i32_0 = arith.constant 0 : i32
    %c0_i32_1 = arith.constant 0 : i32
    return %c0_i32, %c0_i32_0 : i32, i32
  }
}

</mosaic_0001>

<llo_original>
// kernel: tpu_custom_call.1
$region0: #{tpu_custom_call.1}
  #allocation0 [shape = 'u32[]', space=smem, size = 0x4, offset = 0x4, fixed_abs, tag = 'smem constant byte address 0x4 - core index']
  #allocation1 [shape = 'u32[144,128]{1,0:T(1,128)}', space=vmem, size = 0x12000, scoped, tag = 'internal scratch']
  #allocation2 [shape = 'f32[1,128]{1,0:T(1,128)}', space=vmem, size = 0x200, scoped, tag = 'scratch operand']
  %s0 = inlined_call_operand.hbm [shape: f32[90,128], index: 0, kind: input, shape index: {}]
  %s1 = inlined_call_operand.hbm [shape: f32[90,128], index: 1, kind: input, shape index: {}]
  %s2 = inlined_call_operand.hbm [shape: f32[1,1], index: 2, kind: output, shape index: {}]
  %s3 = sld [smem:[#allocation0]]
  $region34: #{tpu_custom_call.1} parent=0
    _
  %s5 = ssub.s32 1, %s3
  %s6 = scalar_select 0, %s5, %s3
  $region1: #{tpu_custom_call.1} parent=0
    #allocation3 [shape = 'u8[49152]{0}', space=vmem, size = 0xc000, scoped, tag = 'input window, operand 0, single buffered']
    #allocation4 [shape = 's32[1]{0}', space=sflag, size = 0x4, scoped, tag = 'scoped memory for tpu_custom_call.1']
    #allocation5 [shape = 's32[1]{0}', space=sflag, size = 0x4, scoped, tag = 'scoped memory for tpu_custom_call.1']
    #allocation6 [shape = 'u8[49152]{0}', space=vmem, size = 0xc000, scoped, tag = 'input window, operand 1, single buffered']
    #allocation7 [shape = 's32[1]{0}', space=sflag, size = 0x4, scoped, tag = 'scoped memory for tpu_custom_call.1']
    #allocation8 [shape = 'u8[512]{0}', space=smem, size = 0x200, scoped, tag = 'output window, operand 0, single buffered']
    %7 = vsyncpa [#allocation4], 0
    %8 = vsyncpa [#allocation7], 0
    %9 = vsyncpa [#allocation5], 0
    // Predicated region
    $region2: #{tpu_custom_call.1} parent=1 // pred_check
      _
    $region3: #{tpu_custom_call.1} parent=1 // pred_check_branch
      %11 = sbr.rel (0) target = $region5
    $region4: #{tpu_custom_call.1} parent=1 // pred_region
      %s13 = ssub.s32 1536, 1536
      %14 = vsyncadd [#allocation4], %s13
      %s15 = sshll.u32 [#allocation3], 4
      %s16 = int_to_ptr.vmem [resolvable:$true] %s15
      %21 = dma.hbm_to_vmem [thread:$0]  %s0, 1536, %s16, [#allocation4], 128, 128, 8
    $region5: #{tpu_custom_call.1} parent=1 // pred_fallthru
      _
    // Predicated region
    $region6: #{tpu_custom_call.1} parent=1 // pred_check
      _
    $region7: #{tpu_custom_call.1} parent=1 // pred_check_branch
      %23 = sbr.rel (0) target = $region9
    $region8: #{tpu_custom_call.1} parent=1 // pred_region
      %s25 = ssub.s32 1536, 1536
      %26 = vsyncadd [#allocation7], %s25
      %s27 = sshll.u32 [#allocation6], 4
      %s28 = int_to_ptr.vmem [resolvable:$true] %s27
      %33 = dma.hbm_to_vmem [thread:$0]  %s1, 1536, %s28, [#allocation7], 128, 128, 8
    $region9: #{tpu_custom_call.1} parent=1 // pred_fallthru
      _
    // Predicated region
    $region10: #{tpu_custom_call.1} parent=1 // pred_check
      _
    $region11: #{tpu_custom_call.1} parent=1 // pred_check_branch
      %35 = sbr.rel (0) target = $region13
    $region12: #{tpu_custom_call.1} parent=1 // pred_region
      %36 = dma.done [#allocation4], 1536
    $region13: #{tpu_custom_call.1} parent=1 // pred_fallthru
      _
    // Predicated region
    $region14: #{tpu_custom_call.1} parent=1 // pred_check
      _
    $region15: #{tpu_custom_call.1} parent=1 // pred_check_branch
      %38 = sbr.rel (0) target = $region17
    $region16: #{tpu_custom_call.1} parent=1 // pred_region
      %39 = dma.done [#allocation7], 1536
    $region17: #{tpu_custom_call.1} parent=1 // pred_fallthru
      _
    %p40 = scmp.eq.s32.totalorder 0, 0
    // Predicated region
    $region18: #{tpu_custom_call.1} parent=1 // pred_check
      %p41 = pneg %p40
    $region19: #{tpu_custom_call.1} parent=1 // pred_check_branch
      %43 = sbr.rel (%p41) target = $region21
    $region20: #{tpu_custom_call.1} parent=1 // pred_region
      %44 = vst [vmem:[#allocation2] sm:$0x1] 0.0
    $region21: #{tpu_custom_call.1} parent=1 // pred_fallthru
      _
    %v45 = vld [vmem:[#allocation3] sm:$0xff]
    %v46 = vld [vmem:[#allocation3 + $0x8] sm:$0xff]
    %v47 = vld [vmem:[#allocation3 + $0x10] sm:$0xff]
    %v48 = vld [vmem:[#allocation3 + $0x18] sm:$0xff]
    %v49 = vld [vmem:[#allocation3 + $0x20] sm:$0xff]
    %v50 = vld [vmem:[#allocation3 + $0x28] sm:$0xff]
    %v51 = vld [vmem:[#allocation3 + $0x30] sm:$0xff]
    %v52 = vld [vmem:[#allocation3 + $0x38] sm:$0xff]
    %v53 = vld [vmem:[#allocation3 + $0x40] sm:$0xff]
    %v54 = vld [vmem:[#allocation3 + $0x48] sm:$0xff]
    %v55 = vld [vmem:[#allocation3 + $0x50] sm:$0xff]
    %v56 = vld [vmem:[#allocation3 + $0x58] sm:$0x3]
    %v57 = vld [vmem:[#allocation6] sm:$0xff]
    %v58 = vld [vmem:[#allocation6 + $0x8] sm:$0xff]
    %v59 = vld [vmem:[#allocation6 + $0x10] sm:$0xff]
    %v60 = vld [vmem:[#allocation6 + $0x18] sm:$0xff]
    %v61 = vld [vmem:[#allocation6 + $0x20] sm:$0xff]
    %v62 = vld [vmem:[#allocation6 + $0x28] sm:$0xff]
    %v63 = vld [vmem:[#allocation6 + $0x30] sm:$0xff]
    %v64 = vld [vmem:[#allocation6 + $0x38] sm:$0xff]
    %v65 = vld [vmem:[#allocation6 + $0x40] sm:$0xff]
    %v66 = vld [vmem:[#allocation6 + $0x48] sm:$0xff]
    %v67 = vld [vmem:[#allocation6 + $0x50] sm:$0xff]
    %v68 = vld [vmem:[#allocation6 + $0x58] sm:$0x3]
    %v69 = vld [vmem:[#allocation2] sm:$0x1]
    %v70 = vsub.f32 %v57, %v45
    %v71 = vmul.f32 %v70, %v70
    %v73 = vrot.slane %v71, 1
    %v75 = vadd.f32 %v71, %v73
    %v76 = vand.u32 2147483647, %v57
    %v77 = vrsqrt.pop %v76
    %v78 = vmul.f32 %v76, %v77
    %vm79 = vcmp.eq.f32.partialorder %v76, inf
    %v80 = vsel %vm79, %v76, %v78
    %vm81 = vcmp.eq.f32.partialorder %v76, 0.0
    %v82 = vand.u32 %v76, 2147483648
    %v83 = vsel %vm81, %v82, %v80
    %v84 = vand.u32 2147483647, %v45
    %v85 = vrsqrt.pop %v84
    %v86 = vmul.f32 %v84, %v85
    %vm87 = vcmp.eq.f32.partialorder %v84, inf
    %v88 = vsel %vm87, %v84, %v86
    %vm89 = vcmp.eq.f32.partialorder %v84, 0.0
    %v90 = vand.u32 %v84, 2147483648
    %v91 = vsel %vm89, %v90, %v88
    %v92 = vsub.f32 %v83, %v91
    %v93 = vmul.f32 %v92, %v92
    %v95 = vrot.slane %v93, 1
    %v97 = vadd.f32 %v93, %v95
    %v98 = vmul.f32 %v45, 0.5
    %v100 = vrot.slane %v98, 2
    %v102 = vsub.f32 %v45, %v100
    %v103 = vadd.f32 %v45, %v100
    %v104 = vmul.f32 %v57, 0.5
    %v106 = vrot.slane %v104, 2
    %v108 = vsub.f32 %v57, %v106
    %v109 = vadd.f32 %v57, %v106
    %v110 = vmax.f32 %v102, %v108
    %v111 = vmin.f32 %v103, %v109
    %v112 = vsub.f32 %v111, %v110
    %v113 = vmax.f32 %v112, 0.0
    %v115 = vrot.slane %v113, 1
    %v117 = vmul.f32 %v113, %v115
    %v118 = vsub.f32 %v103, %v102
    %v120 = vrot.slane %v118, 1
    %v122 = vmul.f32 %v118, %v120
    %v123 = vand.u32 2147483647, %v122
    %v124 = vsub.f32 %v109, %v108
    %v126 = vrot.slane %v124, 1
    %v128 = vmul.f32 %v124, %v126
    %v129 = vand.u32 2147483647, %v128
    %v130 = vadd.f32 %v123, %v129
    %v131 = vsub.f32 %v130, %v117
    %v132 = vadd.f32 %v131, 1e-06
    %v133 = vrcp.pop %v132
    %v134 = vmul.f32 %v117, %v133
    %v136 = vrot.slane %v134, 1
    %v138 = vmul.f32 %v45, %v136
    %v139 = vsub.f32 %v57, %v138
    %v140 = vmul.f32 %v139, %v139
    %v142 = vrot.slane %v97, 2
    %v144 = vadd.f32 %v75, %v142
    %v145 = vmul.f32 %v144, 5.0
    %v147 = vrot.slane %v57, 7
    %v149 = vmul.f32 %v145, %v147
    %v150 = vadd.f32 %v149, 0.0
    %v151 = vsub.f32 1.0, %v57
    %v152 = vmul.f32 %v151, 0.5
    %v153 = vadd.f32 %v57, %v152
    %v154 = vmul.f32 %v140, %v153
    %v156 = vrot.slane %v154, 7
    %v158 = vadd.f32 %v150, %v156
    %v159 = vand.u32 2147483647, %v58
    %v160 = vrsqrt.pop %v159
    %v161 = vmul.f32 %v159, %v160
    %vm162 = vcmp.eq.f32.partialorder %v159, inf
    %v163 = vsel %vm162, %v159, %v161
    %vm164 = vcmp.eq.f32.partialorder %v159, 0.0
    %v165 = vand.u32 %v159, 2147483648
    %v166 = vsel %vm164, %v165, %v163
    %v167 = vand.u32 2147483647, %v46
    %v168 = vrsqrt.pop %v167
    %v169 = vmul.f32 %v167, %v168
    %vm170 = vcmp.eq.f32.partialorder %v167, inf
    %v171 = vsel %vm170, %v167, %v169
    %vm172 = vcmp.eq.f32.partialorder %v167, 0.0
    %v173 = vand.u32 %v167, 2147483648
    %v174 = vsel %vm172, %v173, %v171
    %v175 = vsub.f32 %v166, %v174
    %v176 = vmul.f32 %v175, %v175
    %v178 = vrot.slane %v176, 1
    %v180 = vadd.f32 %v176, %v178
    %v181 = vmul.f32 %v46, 0.5
    %v183 = vrot.slane %v181, 2
    %v185 = vsub.f32 %v45, %v183
    %v186 = vadd.f32 %v45, %v183
    %v187 = vmul.f32 %v58, 0.5
    %v189 = vrot.slane %v187, 2
    %v191 = vsub.f32 %v57, %v189
    %v192 = vadd.f32 %v57, %v189
    %v193 = vmax.f32 %v185, %v191
    %v194 = vmin.f32 %v186, %v192
    %v195 = vsub.f32 %v194, %v193
    %v196 = vmax.f32 %v195, 0.0
    %v198 = vrot.slane %v196, 1
    %v200 = vmul.f32 %v196, %v198
    %v201 = vsub.f32 %v186, %v185
    %v203 = vrot.slane %v201, 1
    %v205 = vmul.f32 %v201, %v203
    %v206 = vand.u32 2147483647, %v205
    %v207 = vsub.f32 %v192, %v191
    %v209 = vrot.slane %v207, 1
    %v211 = vmul.f32 %v207, %v209
    %v212 = vand.u32 2147483647, %v211
    %v213 = vadd.f32 %v206, %v212
    %v214 = vsub.f32 %v213, %v200
    %v215 = vadd.f32 %v214, 1e-06
    %v216 = vrcp.pop %v215
    %v217 = vmul.f32 %v200, %v216
    %v219 = vrot.slane %v217, 1
    %v221 = vmul.f32 %v45, %v219
    %v222 = vsub.f32 %v57, %v221
    %v223 = vmul.f32 %v222, %v222
    %v225 = vrot.slane %v180, 2
    %v227 = vadd.f32 %v75, %v225
    %v228 = vmul.f32 %v227, 5.0
    %v229 = vmul.f32 %v228, %v147
    %v231 = vrot.slane %v229, 5
    %v233 = vadd.f32 %v158, %v231
    %v234 = vmul.f32 %v223, %v153
    %v236 = vrot.slane %v234, 4
    %v238 = vadd.f32 %v233, %v236
    %v239 = vsub.f32 %v58, %v46
    %v240 = vsub.f32 %v59, %v47
    %v241 = vsub.f32 %v60, %v48
    %v242 = vsub.f32 %v61, %v49
    %v243 = vsub.f32 %v62, %v50
    %v244 = vsub.f32 %v63, %v51
    %v245 = vsub.f32 %v64, %v52
    %v246 = vsub.f32 %v65, %v53
    %v247 = vsub.f32 %v66, %v54
    %v248 = vsub.f32 %v67, %v55
    %v249 = vsub.f32 %v68, %v56
    %v250 = vmul.f32 %v239, %v239
    %v251 = vmul.f32 %v240, %v240
    %v252 = vmul.f32 %v241, %v241
    %v253 = vmul.f32 %v242, %v242
    %v254 = vmul.f32 %v243, %v243
    %v255 = vmul.f32 %v244, %v244
    %v256 = vmul.f32 %v245, %v245
    %v257 = vmul.f32 %v246, %v246
    %v258 = vmul.f32 %v247, %v247
    %v259 = vmul.f32 %v248, %v248
    %v260 = vmul.f32 %v249, %v249
    %v261 = vmul.f32 %v250, %v58
    %v262 = vmul.f32 %v251, %v59
    %v263 = vmul.f32 %v252, %v60
    %v264 = vmul.f32 %v253, %v61
    %v265 = vmul.f32 %v254, %v62
    %v266 = vmul.f32 %v255, %v63
    %v267 = vmul.f32 %v256, %v64
    %v268 = vmul.f32 %v257, %v65
    %v269 = vmul.f32 %v258, %v66
    %v270 = vmul.f32 %v259, %v67
    %v271 = vmul.f32 %v260, %v68
    %vm283 = vcmask 1045504
    %v284 = vrot.slane %v261, 2
    %v285 = vrot.slane %v262, 2
    %v286 = vsel %vm283, %v284, %v285
    %v287 = vrot.slane %v263, 2
    %v288 = vsel %vm283, %v285, %v287
    %v289 = vrot.slane %v264, 2
    %v290 = vsel %vm283, %v287, %v289
    %v291 = vrot.slane %v265, 2
    %v292 = vsel %vm283, %v289, %v291
    %v293 = vrot.slane %v266, 2
    %v294 = vsel %vm283, %v291, %v293
    %v295 = vrot.slane %v267, 2
    %v296 = vsel %vm283, %v293, %v295
    %v297 = vrot.slane %v268, 2
    %v298 = vsel %vm283, %v295, %v297
    %v299 = vrot.slane %v269, 2
    %v300 = vsel %vm283, %v297, %v299
    %v301 = vrot.slane %v270, 2
    %v302 = vsel %vm283, %v299, %v301
    %v303 = vrot.slane %v271, 2
    %v304 = vsel %vm283, %v301, %v303
    %v315 = vadd.f32 %v286, %v288
    %v316 = vadd.f32 %v315, %v290
    %v317 = vadd.f32 %v316, %v292
    %v318 = vadd.f32 %v317, %v294
    %v319 = vadd.f32 %v318, %v296
    %v320 = vadd.f32 %v319, %v298
    %v321 = vadd.f32 %v320, %v300
    %v322 = vadd.f32 %v321, %v302
    %v323 = vadd.f32 %v322, %v304
    %v324 = vrot.slane %v323, 4
    %v325 = vadd.f32 %v323, %v324
    %v326 = vrot.slane %v325, 2
    %v327 = vadd.f32 %v325, %v326
    %v328 = vrot.slane %v327, 1
    %v329 = vadd.f32 %v327, %v328
    %v330 = vadd.f32 %v238, %v329
    %v333 = vunpack.c.l.s4 1966171168
    %v334 = vunpack.c.0.s8 %v333
    %v335 = vlaneseq
    %v336 = vshrl.u32 %v335, 7
    %v337 = vsub.s32 %v334, %v336
    %v338 = vrot.slane %v330, %v337
    %v339 = vcombine.high %v338, %v338
    %v341 = vunpack.c.l.s4 1966171168
    %v342 = vunpack.c.0.s8 %v341
    %v343 = vlaneseq
    %v344 = vshrl.u32 %v343, 7
    %v345 = vsub.s32 %v342, %v344
    %v346 = vrot.slane %v339, %v345
    %v348 = vadd.f32 %v69, %v346
    %349 = vst [vmem:[#allocation2] sm:$0x1] %v348
    // Predicated region
    $region22: #{tpu_custom_call.1} parent=1 // pred_check
      %p350 = pneg %p40
    $region23: #{tpu_custom_call.1} parent=1 // pred_check_branch
      %352 = sbr.rel (%p350) target = $region25
    $region24: #{tpu_custom_call.1} parent=1 // pred_region
      %v353 = vld [vmem:[#allocation2] sm:$0x1]
      %vm354 = vcmask 1040384
      %v355 = vsel %vm354, %v353, 0.0
      %356 = vadd.xlane.f32.xlu0 %v355
      %v357 = vpop.xlane.xlu0 %356
      %v358 = vrot.slane %v357, 4
      %v359 = vadd.f32 %v357, %v358
      %v360 = vrot.slane %v359, 2
      %v361 = vadd.f32 %v359, %v360
      %v362 = vrot.slane %v361, 1
      %v363 = vadd.f32 %v361, %v362
      %s364 = vtos %v363
      %s365 = scalar_lea.smem [#allocation8], 0
      %366 = sst [smem:[%s365]] %s364
    $region25: #{tpu_custom_call.1} parent=1 // pred_fallthru
      _
    // Predicated region
    $region26: #{tpu_custom_call.1} parent=1 // pred_check
      _
    $region27: #{tpu_custom_call.1} parent=1 // pred_check_branch
      %368 = sbr.rel (0) target = $region29
    $region28: #{tpu_custom_call.1} parent=1 // pred_region
      %s370 = ssub.s32 16, 16
      %371 = vsyncadd [#allocation5], %s370
      %374 = dma.smem_to_hbm [#allocation8], 16, %s2, [#allocation5]
    $region29: #{tpu_custom_call.1} parent=1 // pred_fallthru
      _
    // Predicated region
    $region30: #{tpu_custom_call.1} parent=1 // pred_check
      _
    $region31: #{tpu_custom_call.1} parent=1 // pred_check_branch
      %376 = sbr.rel (0) target = $region33
    $region32: #{tpu_custom_call.1} parent=1 // pred_region
      %377 = dma.done [#allocation5], 16
    $region33: #{tpu_custom_call.1} parent=1 // pred_fallthru
      _
    %378 = sfence
    %379 = vsyncpa [#allocation4], 1
    %380 = vsyncpa [#allocation7], 1
    %381 = vsyncpa [#allocation5], 1

</llo_original>
